<compile_context>
chip_gen: v5e
topology: v5e:2x2
jax: 0.10.0
libtpu: 0.0.40
codegen_flags: <defaults>
</compile_context>

<pallas_src>
import functools

import jax
import jax.numpy as jnp
from jax.experimental import pallas as pl
from jax.experimental.pallas import tpu as pltpu


def _round_up(x, m):
    return (x + m - 1) // m * m


def _default_num_partitions():
    # 2-TensorCore chips (v7x) benefit from a parallel row split; single-TC
    # chips (v5e/v6e) only pay extra grid steps for it.
    try:
        kind = jax.devices()[0].device_kind.lower()
        return 2 if "v7" in kind else 1
    except Exception:  # pragma: no cover - conservative fallback
        return 1


def _masked_nll_kernel(pred_ref, tgt_ref, s_ref, out_ref, *,
                       n_rows, n_tiles, tiles_per_part,
                       needs_tile_guard, has_row_tail):
    t = pl.program_id(1)
    kc = pl.program_id(2)

    @pl.when((t == 0) & (kc == 0))
    def _init():
        out_ref[...] = jnp.zeros_like(out_ref)

    row_blk = pl.program_id(0) * tiles_per_part + t

    def _accumulate():
        pred = pred_ref[...]            # (tm, tc) native-dtype log-probs
        tgt = tgt_ref[...]              # (tm, 1)  i32 class indices
        s = s_ref[...]                  # (tm, 1)  f32 scale = mask * weight[target]
        tm, tc = pred.shape

        # Local (per class-tile) target column; rows past n_rows get -1 so they
        # can never match the non-negative lane iota, and their scale is zeroed
        # (guards garbage from a partial last row block).
        tgt_local = tgt - kc * tc
        s_ok = s
        if has_row_tail:
            row_ids = row_blk * tm + jax.lax.broadcasted_iota(jnp.int32, (tm, 1), 0)
            row_ok = row_ids < n_rows
            tgt_local = jnp.where(row_ok, tgt_local, -1)
            s_ok = jnp.where(row_ok, s, 0.0)

        lane = jax.lax.broadcasted_iota(jnp.int32, (tm, tc), 1)
        sel = lane == tgt_local          # at most one True per valid row
        # Out-of-range columns of a partial last class block can never be
        # selected (targets are < C), so OOB pred data is masked to 0 here.
        picked = jnp.where(sel, pred, 0).astype(jnp.float32) * s_ok   # (tm, tc)

        # Fold sublane row-groups with plain vreg adds (VPU only, no XLU
        # cross-lane reduce, no SMEM scalar accumulate).
        part = picked[0:8, :]
        for g in range(1, tm // 8):
            part = part + picked[g * 8:(g + 1) * 8, :]
        out_ref[...] += part             # (8, tc) resident accumulator

    if needs_tile_guard:
        pl.when(row_blk < n_tiles)(_accumulate)
    else:
        _accumulate()


def masked_nll_loss(pred, target, mask, weight=None, *,
                    block_rows=256, block_cols=4096, num_partitions=None):
    """pred: (N, C) log-probs; target: (N,) int; mask: (B, S) with B*S == N."""
    n, c = pred.shape
    target = target.reshape(n).astype(jnp.int32)
    mask_flat = mask.reshape(n).astype(jnp.float32)

    # Per-row scale; with weight=None it is just the mask, so a single code path
    # covers both module branches.  Denominator is computed entirely here.
    if weight is None:
        s = mask_flat
    else:
        w = jnp.asarray(weight).reshape(c).astype(jnp.float32)
        s = mask_flat * w[target]
    den = jnp.sum(s)   # == sum(mask) when weight is None  (NaN if fully masked,
                       #  matching the PyTorch reference)

    # Tiny-N guard only (need >= 8 rows for a legal block); padded rows carry
    # s == 0 and pred == 0 so they contribute nothing.
    if n < 8:
        pad = 8 - n
        pred = jnp.pad(pred, ((0, pad), (0, 0)))
        target = jnp.pad(target, (0, pad))
        s = jnp.pad(s, (0, pad))
        n = n + pad

    # ---- row tiling (no full-array padding: tails handled in-kernel) ----
    tm = min(_round_up(max(block_rows, 8), 32), (n // 8) * 8)
    n_tiles = pl.cdiv(n, tm)
    if num_partitions is None:
        num_partitions = _default_num_partitions()
    p_parts = max(1, min(int(num_partitions), n_tiles))
    tiles_per_part = pl.cdiv(n_tiles, p_parts)
    p_parts = pl.cdiv(n_tiles, tiles_per_part)        # no fully-empty partitions
    needs_tile_guard = p_parts * tiles_per_part != n_tiles
    has_row_tail = n_tiles * tm != n

    # ---- class tiling: lane-aligned blocks; class tail masked in-kernel ----
    if c < 128:
        tc = c
    else:
        tc = min(max(128, (block_cols // 128) * 128), (c // 128) * 128)
    kc_tiles = pl.cdiv(c, tc)

    # Double-buffered streams + headroom for full-tile temporaries; lift the
    # conservative scoped default but stay well below v7x's 64 MiB physical VMEM.
    itemsize = jnp.dtype(pred.dtype).itemsize
    tc_pad = _round_up(tc, 128)
    est = (2 * tm * tc_pad * itemsize      # pred tiles (double-buffered)
           + 4 * tm * 128 * 4              # target + s tiles (lane-padded, 2 bufs)
           + 2 * 8 * tc_pad * 4            # output block buffers
           + 4 * tm * tc_pad * 4)          # headroom for (tm, tc) f32 temporaries
    vmem_limit = int(min(max(est, 32 * 1024 * 1024), 56 * 1024 * 1024))

    T = tiles_per_part
    last_blk = n_tiles - 1

    def _row_block(p, t):
        rb = p * T + t
        if needs_tile_guard:
            # Keep the DMA in bounds for tail tiles of the last partition; the
            # kernel skips compute on those steps via pl.when.
            rb = jnp.minimum(rb, last_blk)
        return rb

    kernel = functools.partial(
        _masked_nll_kernel, n_rows=n, n_tiles=n_tiles, tiles_per_part=T,
        needs_tile_guard=needs_tile_guard, has_row_tail=has_row_tail)

    parts = pl.pallas_call(
        kernel,
        out_shape=jax.ShapeDtypeStruct((p_parts * 8, tc), jnp.float32),
        grid_spec=pltpu.PrefetchScalarGridSpec(
            num_scalar_prefetch=0,
            grid=(p_parts, T, kc_tiles),
            in_specs=[
                pl.BlockSpec((tm, tc), lambda p, t, kc: (_row_block(p, t), kc)),  # pred
                pl.BlockSpec((tm, 1), lambda p, t, kc: (_row_block(p, t), 0)),    # target
                pl.BlockSpec((tm, 1), lambda p, t, kc: (_row_block(p, t), 0)),    # s
            ],
            out_specs=pl.BlockSpec((8, tc), lambda p, t, kc: (p, 0)),
        ),
        compiler_params=pltpu.CompilerParams(
            dimension_semantics=("parallel", "arbitrary", "arbitrary"),
            vmem_limit_bytes=vmem_limit,
        ),
    )(pred, target.reshape(n, 1), s.reshape(n, 1))

    num = jnp.sum(parts)          # tiny (P*8, tc) reduction in XLA
    return -(num / den)


def _reference(pred, target, mask, weight=None):
    n, c = pred.shape
    if weight is None:
        weight = jnp.ones((c,), dtype=jnp.float32)
    m = mask.reshape(-1).astype(jnp.float32)
    picked = pred[jnp.arange(n), target]
    w_t = weight[target]
    return -jnp.sum(w_t * m * picked) / jnp.sum(w_t * m)


if __name__ == "__main__":
    key = jax.random.PRNGKey(0)

    # Shapes consistent with the module: pred (batch*seq_len, n_classes),
    # target (batch*seq_len,), mask (batch, seq_len).
    batch, seq_len, n_classes = 2, 8, 7
    n = batch * seq_len
    k1, k2, k3, k4 = jax.random.split(key, 4)
    logits = jax.random.normal(k1, (n, n_classes), dtype=jnp.float32)
    pred = jax.nn.log_softmax(logits, axis=-1)            # log-probs, as NLLLoss expects
    target = jax.random.randint(k2, (n,), 0, n_classes, dtype=jnp.int32)
    mask = (jax.random.uniform(k3, (batch, seq_len)) > 0.3).astype(jnp.float32)
    weight = jax.random.uniform(k4, (n_classes,), minval=0.5, maxval=1.5,
                                dtype=jnp.float32)

    # weight=None branch of the module.
    loss = masked_nll_loss(pred, target, mask)
    jax.block_until_ready(loss)
    ref = _reference(pred, target, mask)
    assert jnp.allclose(loss, ref, atol=1e-5, rtol=1e-5), (loss, ref)

    # class-weight branch of the module.
    loss_w = masked_nll_loss(pred, target, mask, weight)
    jax.block_until_ready(loss_w)
    ref_w = _reference(pred, target, mask, weight)
    assert jnp.allclose(loss_w, ref_w, atol=1e-5, rtol=1e-5), (loss_w, ref_w)

    # Small shape exercising row/class tiling, the partial class tail, the
    # partial row tail and multi-step accumulation (grid = (2, 2, 2)).
    batch2, seq2, c2 = 3, 41, 150
    n2 = batch2 * seq2
    k5, k6, k7, k8 = jax.random.split(jax.random.PRNGKey(1), 4)
    pred2 = jax.nn.log_softmax(
        jax.random.normal(k5, (n2, c2), dtype=jnp.float32), axis=-1)
    target2 = jax.random.randint(k6, (n2,), 0, c2, dtype=jnp.int32)
    mask2 = (jax.random.uniform(k7, (batch2, seq2)) > 0.5).astype(jnp.float32)
    weight2 = jax.random.uniform(k8, (c2,), minval=0.5, maxval=1.5,
                                 dtype=jnp.float32)
    loss2 = masked_nll_loss(pred2, target2, mask2, weight2,
                            block_rows=32, block_cols=128, num_partitions=2)
    jax.block_until_ready(loss2)
    ref2 = _reference(pred2, target2, mask2, weight2)
    assert jnp.allclose(loss2, ref2, atol=1e-4, rtol=1e-4), (loss2, ref2)

    # Shape where the partition split does not divide the row tiles evenly,
    # exercising the index-clamp + pl.when tile guard path.
    batch3, seq3, c3 = 5, 31, 200
    n3 = batch3 * seq3
    k9, k10, k11 = jax.random.split(jax.random.PRNGKey(2), 3)
    pred3 = jax.nn.log_softmax(
        jax.random.normal(k9, (n3, c3), dtype=jnp.float32), axis=-1)
    target3 = jax.random.randint(k10, (n3,), 0, c3, dtype=jnp.int32)
    mask3 = (jax.random.uniform(k11, (batch3, seq3)) > 0.4).astype(jnp.float32)
    loss3 = masked_nll_loss(pred3, target3, mask3,
                            block_rows=32, block_cols=256, num_partitions=2)
    jax.block_until_ready(loss3)
    ref3 = _reference(pred3, target3, mask3)
    assert jnp.allclose(loss3, ref3, atol=1e-4, rtol=1e-4), (loss3, ref3)

    print("KERNEL_OK")
</pallas_src>

<mosaic_0001>
module attributes {stable_mosaic.version = 11 : i64} {
  func.func @_masked_nll_kernel(%arg0: i32, %arg1: i32, %arg2: i32, %arg3: memref<16x7xf32, #tpu.memory_space<vmem>>, %arg4: memref<16x1xi32, #tpu.memory_space<vmem>>, %arg5: memref<16x1xf32, #tpu.memory_space<vmem>>, %arg6: memref<8x7xf32, #tpu.memory_space<vmem>>) attributes {dimension_semantics = [#tpu.dimension_semantics<parallel>, #tpu.dimension_semantics<arbitrary>, #tpu.dimension_semantics<arbitrary>], iteration_bounds = array<i64: 1, 1, 1>, scalar_prefetch = 0 : i64, scratch_operands = 0 : i64, tpu.core_type = #tpu.core_type<tc>, window_params = [{transform_indices = @transform_0, window_bounds = array<i64: 16, 7>}, {transform_indices = @transform_1, window_bounds = array<i64: 16, 1>}, {transform_indices = @transform_2, window_bounds = array<i64: 16, 1>}, {transform_indices = @transform_3, window_bounds = array<i64: 8, 7>}]} {
    %c0_i32 = arith.constant 0 : i32
    %0 = arith.cmpi eq, %arg1, %c0_i32 : i32
    %c0_i32_0 = arith.constant 0 : i32
    %1 = arith.cmpi eq, %arg2, %c0_i32_0 : i32
    %2 = arith.andi %0, %1 : i1
    %3 = arith.extui %2 : i1 to i32
    %c0_i32_1 = arith.constant 0 : i32
    %4 = arith.cmpi ne, %3, %c0_i32_1 : i32
    scf.if %4 {
      %cst = arith.constant 0.000000e+00 : f32
      %25 = vector.broadcast %cst : f32 to vector<8x7xf32>
      %c0_12 = arith.constant 0 : index
      %c0_13 = arith.constant 0 : index
      %26 = vector.load %arg6[%c0_12, %c0_13] : memref<8x7xf32, #tpu.memory_space<vmem>>, vector<8x7xf32>
      tpu.vector_store %arg6[%c0_12, %c0_13], %25 {strides = array<i32>} : memref<8x7xf32, #tpu.memory_space<vmem>>, vector<8x7xf32>,
    } else {
    }
    %c0 = arith.constant 0 : index
    %c0_2 = arith.constant 0 : index
    %5 = vector.load %arg3[%c0, %c0_2] : memref<16x7xf32, #tpu.memory_space<vmem>>, vector<16x7xf32>
    %c0_3 = arith.constant 0 : index
    %c0_4 = arith.constant 0 : index
    %6 = vector.load %arg4[%c0_3, %c0_4] : memref<16x1xi32, #tpu.memory_space<vmem>>, vector<16x1xi32>
    %c0_5 = arith.constant 0 : index
    %c0_6 = arith.constant 0 : index
    %7 = vector.load %arg5[%c0_5, %c0_6] : memref<16x1xf32, #tpu.memory_space<vmem>>, vector<16x1xf32>
    %c7_i32 = arith.constant 7 : i32
    %8 = arith.muli %arg2, %c7_i32 : i32
    %9 = vector.broadcast %8 : i32 to vector<16x1xi32>
    %10 = arith.subi %6, %9 : vector<16x1xi32>
    %11 = tpu.iota {dimensions = array<i32: 1>} : vector<16x7xi32>
    %12 = vector.broadcast %10 : vector<16x1xi32> to vector<16x7xi32>
    %13 = arith.cmpi eq, %11, %12 : vector<16x7xi32>
    %c0_i32_7 = arith.constant 0 : i32
    %14 = arith.sitofp %c0_i32_7 : i32 to f32
    %15 = vector.broadcast %14 : f32 to vector<16x7xf32>
    %16 = arith.select %13, %5, %15 : vector<16x7xi1>, vector<16x7xf32>
    %17 = vector.broadcast %7 : vector<16x1xf32> to vector<16x7xf32>
    %18 = arith.mulf %16, %17 : vector<16x7xf32>
    %19 = vector.extract_strided_slice %18 {offsets = [0, 0], sizes = [8, 7], strides = [1, 1]} : vector<16x7xf32> to vector<8x7xf32>
    %20 = vector.extract_strided_slice %18 {offsets = [8, 0], sizes = [8, 7], strides = [1, 1]} : vector<16x7xf32> to vector<8x7xf32>
    %21 = arith.addf %19, %20 : vector<8x7xf32>
    %c0_8 = arith.constant 0 : index
    %c0_9 = arith.constant 0 : index
    %22 = vector.load %arg6[%c0_8, %c0_9] : memref<8x7xf32, #tpu.memory_space<vmem>>, vector<8x7xf32>
    %23 = arith.addf %22, %21 : vector<8x7xf32>
    %c0_10 = arith.constant 0 : index
    %c0_11 = arith.constant 0 : index
    %24 = vector.load %arg6[%c0_10, %c0_11] : memref<8x7xf32, #tpu.memory_space<vmem>>, vector<8x7xf32>
    tpu.vector_store %arg6[%c0_10, %c0_11], %23 {strides = array<i32>} : memref<8x7xf32, #tpu.memory_space<vmem>>, vector<8x7xf32>,
    return
  }
  func.func @transform_0(%arg0: i32, %arg1: i32, %arg2: i32) -> (i32, i32) {
    %c1_i32 = arith.constant 1 : i32
    %0 = arith.muli %arg0, %c1_i32 : i32
    %1 = arith.addi %0, %arg1 : i32
    %c0_i32 = arith.constant 0 : i32
    return %1, %arg2 : i32, i32
  }
  func.func @transform_1(%arg0: i32, %arg1: i32, %arg2: i32) -> (i32, i32) {
    %c1_i32 = arith.constant 1 : i32
    %0 = arith.muli %arg0, %c1_i32 : i32
    %1 = arith.addi %0, %arg1 : i32
    %c0_i32 = arith.constant 0 : i32
    %c0_i32_0 = arith.constant 0 : i32
    return %1, %c0_i32 : i32, i32
  }
  func.func @transform_2(%arg0: i32, %arg1: i32, %arg2: i32) -> (i32, i32) {
    %c1_i32 = arith.constant 1 : i32
    %0 = arith.muli %arg0, %c1_i32 : i32
    %1 = arith.addi %0, %arg1 : i32
    %c0_i32 = arith.constant 0 : i32
    %c0_i32_0 = arith.constant 0 : i32
    return %1, %c0_i32 : i32, i32
  }
  func.func @transform_3(%arg0: i32, %arg1: i32, %arg2: i32) -> (i32, i32) {
    %c0_i32 = arith.constant 0 : i32
    %c0_i32_0 = arith.constant 0 : i32
    return %arg0, %c0_i32 : i32, i32
  }
}

</mosaic_0001>

<llo_original>
// kernel: tpu_custom_call.1
$region0: #{tpu_custom_call.1}
  #allocation0 [shape = 'u32[]', space=smem, size = 0x4, offset = 0x4, fixed_abs, tag = 'smem constant byte address 0x4 - core index']
  #allocation1 [shape = 'u32[72,128]{1,0:T(1,128)}', space=vmem, size = 0x9000, scoped, tag = 'internal scratch']
  %s0 = inlined_call_operand.vmem [shape: f32[16,7], index: 0, kind: input, shape index: {}]
  %s1 = inlined_call_operand.vmem [shape: s32[16,1], index: 1, kind: input, shape index: {}]
  %s2 = inlined_call_operand.vmem [shape: f32[16,1], index: 2, kind: input, shape index: {}]
  %s3 = inlined_call_operand.hbm [shape: f32[8,7], index: 3, kind: output, shape index: {}]
  %s4 = sld [smem:[#allocation0]]
  $region26: #{tpu_custom_call.1} parent=0
    _
  %s6 = ssub.s32 1, %s4
  %s7 = scalar_select 0, %s6, %s4
  $region1: #{tpu_custom_call.1} parent=0
    #allocation2 [shape = 'u8[4096]{0}', space=vmem, size = 0x1000, scoped, tag = 'output window, operand 0, single buffered']
    #allocation3 [shape = 's32[1]{0}', space=sflag, size = 0x4, scoped, tag = 'scoped memory for tpu_custom_call.1']
    %8 = vsyncpa [#allocation3], 0
    // Predicated region
    $region2: #{tpu_custom_call.1} parent=1 // pred_check
      _
    $region3: #{tpu_custom_call.1} parent=1 // pred_check_branch
      %10 = sbr.rel (0) target = $region5
    $region4: #{tpu_custom_call.1} parent=1 // pred_region
      %s11 = sadd.s32 0, 0
      %s12 = smul.u32 2, %s11
      %p13 = scmp.lt.s32.totalorder %s12, 1
      %s14 = scalar_select %p13, %s12, 1
      %s15 = smul.addr %s14, 8
      %s16 = scalar_lea.vmem %s0, %s15
      %s17 = sadd.s32 0, 0
      %s18 = smul.u32 2, %s17
    $region5: #{tpu_custom_call.1} parent=1 // pred_fallthru
      _
    // Predicated region
    $region6: #{tpu_custom_call.1} parent=1 // pred_check
      _
    $region7: #{tpu_custom_call.1} parent=1 // pred_check_branch
      %20 = sbr.rel (0) target = $region9
    $region8: #{tpu_custom_call.1} parent=1 // pred_region
      %s21 = sadd.s32 0, 0
      %s22 = smul.u32 2, %s21
      %p23 = scmp.lt.s32.totalorder %s22, 1
      %s24 = scalar_select %p23, %s22, 1
      %s25 = smul.addr %s24, 8
      %s26 = scalar_lea.vmem %s1, %s25
      %s27 = sadd.s32 0, 0
      %s28 = smul.u32 2, %s27
    $region9: #{tpu_custom_call.1} parent=1 // pred_fallthru
      _
    // Predicated region
    $region10: #{tpu_custom_call.1} parent=1 // pred_check
      _
    $region11: #{tpu_custom_call.1} parent=1 // pred_check_branch
      %30 = sbr.rel (0) target = $region13
    $region12: #{tpu_custom_call.1} parent=1 // pred_region
      %s31 = sadd.s32 0, 0
      %s32 = smul.u32 2, %s31
      %p33 = scmp.lt.s32.totalorder %s32, 1
      %s34 = scalar_select %p33, %s32, 1
      %s35 = smul.addr %s34, 8
      %s36 = scalar_lea.vmem %s2, %s35
      %s37 = sadd.s32 0, 0
      %s38 = smul.u32 2, %s37
    $region13: #{tpu_custom_call.1} parent=1 // pred_fallthru
      _
    %s39 = sadd.s32 0, 0
    %s40 = smul.u32 2, %s39
    %p41 = scmp.lt.s32.totalorder %s40, 1
    %s42 = scalar_select %p41, %s40, 1
    %s43 = smul.addr %s42, 8
    %s44 = scalar_lea.vmem %s0, %s43
    %s45 = sadd.s32 0, 0
    %s46 = smul.u32 2, %s45
    %p47 = scmp.lt.s32.totalorder %s46, 1
    %s48 = scalar_select %p47, %s46, 1
    %s49 = smul.addr %s48, 8
    %s50 = scalar_lea.vmem %s1, %s49
    %s51 = sadd.s32 0, 0
    %s52 = smul.u32 2, %s51
    %p53 = scmp.lt.s32.totalorder %s52, 1
    %s54 = scalar_select %p53, %s52, 1
    %s55 = smul.addr %s54, 8
    %s56 = scalar_lea.vmem %s2, %s55
    %s57 = sadd.s32 0, 0
    %s58 = smul.u32 2, %s57
    %p59 = scmp.lt.s32.totalorder %s58, 1
    %s60 = scalar_select %p59, %s58, 1
    %s61 = smul.addr %s60, 8
    %s62 = scalar_lea.vmem %s0, %s61
    %s63 = sadd.s32 0, 0
    %s64 = smul.u32 2, %s63
    %s65 = sadd.s32 0, 0
    %s66 = smul.u32 2, %s65
    %p67 = scmp.lt.s32.totalorder %s66, 1
    %s68 = scalar_select %p67, %s66, 1
    %s69 = smul.addr %s68, 8
    %s70 = scalar_lea.vmem %s1, %s69
    %s71 = sadd.s32 0, 0
    %s72 = smul.u32 2, %s71
    %s73 = sadd.s32 0, 0
    %s74 = smul.u32 2, %s73
    %p75 = scmp.lt.s32.totalorder %s74, 1
    %s76 = scalar_select %p75, %s74, 1
    %s77 = smul.addr %s76, 8
    %s78 = scalar_lea.vmem %s2, %s77
    %s79 = sadd.s32 0, 0
    %s80 = smul.u32 2, %s79
    %p81 = scmp.eq.s32.totalorder 0, 0
    %p82 = scmp.eq.s32.totalorder 0, 0
    %p83 = pnand %p81, %p82
    %p84 = pneg %p83
    // Predicated region
    $region14: #{tpu_custom_call.1} parent=1 // pred_check
      _
    $region15: #{tpu_custom_call.1} parent=1 // pred_check_branch
      %86 = sbr.rel (%p83) target = $region17
    $region16: #{tpu_custom_call.1} parent=1 // pred_region
      %vm87 = vcmask 56320
      %88 = vst.msk [vmem:[#allocation2] sm:$0xff] %vm87, 0.0
    $region17: #{tpu_custom_call.1} parent=1 // pred_fallthru
      _
    %v89 = vld [vmem:[%s62] sm:$0xff]
    %v90 = vld [vmem:[%s62 + $0x8] sm:$0xff]
    %v91 = vld [vmem:[%s70] sm:$0xff]
    %v92 = vld [vmem:[%s70 + $0x8] sm:$0xff]
    %v93 = vld [vmem:[%s78] sm:$0xff]
    %v94 = vld [vmem:[%s78 + $0x8] sm:$0xff]
    %s95 = smul.u32 0, 7
    %v96 = vstv %s95
    %v97 = vsub.s32 %v91, %v96
    %v98 = vsub.s32 %v92, %v96
    %v99 = vlaneseq
    %v100 = vand.u32 %v99, 127
    %101 = vset.pattern.permute.xlu0 0
    %102 = vperm.xlu0 %101, %v97
    %v103 = vpop.permute.xlu0 %102
    %104 = vset.pattern.permute.xlu0 0
    %105 = vperm.xlu0 %104, %v98
    %v106 = vpop.permute.xlu0 %105
    %vm107 = vcmp.eq.s32.totalorder %v100, %v103
    %vm108 = vcmp.eq.s32.totalorder %v100, %v106
    %v109 = vsel %vm107, %v89, 0.0
    %v110 = vsel %vm108, %v90, 0.0
    %112 = vset.pattern.permute.xlu0 0
    %113 = vperm.xlu0 %112, %v93
    %v114 = vpop.permute.xlu0 %113
    %117 = vset.pattern.permute.xlu0 0
    %118 = vperm.xlu0 %117, %v94
    %v119 = vpop.permute.xlu0 %118
    %v121 = vmul.f32 %v109, %v114
    %v122 = vmul.f32 %v110, %v119
    %v123 = vadd.f32 %v121, %v122
    %v124 = vld [vmem:[#allocation2] sm:$0xff]
    %v125 = vadd.f32 %v124, %v123
    %vm126 = vcmask 56320
    %127 = vst.msk [vmem:[#allocation2] sm:$0xff] %vm126, %v125
    // Predicated region
    $region18: #{tpu_custom_call.1} parent=1 // pred_check
      _
    $region19: #{tpu_custom_call.1} parent=1 // pred_check_branch
      %129 = sbr.rel (0) target = $region21
    $region20: #{tpu_custom_call.1} parent=1 // pred_region
      %131 = vsyncadd [#allocation3], 0
      %s133 = sshll.u32 [#allocation2], 4
      %s134 = int_to_ptr.vmem [resolvable:$true] %s133
      %s135 = sshll.u32 %s3, 4
      %s136 = int_to_ptr.hbm [resolvable:$true] %s135
      %138 = dma.vmem_to_hbm [thread:$0]  %s134, 128, %s136, [#allocation3]
    $region21: #{tpu_custom_call.1} parent=1 // pred_fallthru
      _
    // Predicated region
    $region22: #{tpu_custom_call.1} parent=1 // pred_check
      _
    $region23: #{tpu_custom_call.1} parent=1 // pred_check_branch
      %140 = sbr.rel (0) target = $region25
    $region24: #{tpu_custom_call.1} parent=1 // pred_region
      %142 = dma.done [#allocation3], 128
    $region25: #{tpu_custom_call.1} parent=1 // pred_fallthru
      _
    %143 = vsyncpa [#allocation3], 1

</llo_original>
